<compile_context>
chip_gen: v7x
topology: tpu7x:2x2x1
jax: 0.10.0
libtpu: 0.0.40
codegen_flags: <defaults>
</compile_context>

<pallas_src>
import functools

import jax
import jax.numpy as jnp
from jax.experimental import pallas as pl
from jax.experimental.pallas import tpu as pltpu


def _mixture_kernel(num_components,
                    u_ref, it_ref, w1_ref, w2_ref, wta_ref, bias_ref, o_ref):
    C = num_components
    D = u_ref.shape[0]
    TB = u_ref.shape[1]

    u = u_ref[...]                           # (D, TB) bf16, batch on lanes

    # Two-layer MLP on the MXU (bf16 operands, f32 accumulation), relu in f32.
    h = jnp.maximum(
        jnp.dot(w1_ref[...], u, preferred_element_type=jnp.float32), 0.0)
    h = jnp.maximum(
        jnp.dot(w2_ref[...], h.astype(w2_ref.dtype),
                preferred_element_type=jnp.float32), 0.0)

    # Fused attention+taste projection in ONE matmul: (2*C*D, TB) f32.
    # Rows [0, C*D) are the attention projection, rows [C*D, 2*C*D) the tastes.
    proj = jnp.dot(wta_ref[...], h.astype(wta_ref.dtype),
                   preferred_element_type=jnp.float32)

    # Per-component sum over D: broadcast-multiply against the item embedding
    # (no 2*C replication copy) and reduce the D (sublane) axis.
    it = it_ref[...].astype(jnp.float32)     # elementwise path stays f32 (v5e)
    prod = proj.reshape(2 * C, D, TB) * it[None, :, :]       # (2*C, D, TB)
    red = jnp.sum(prod, axis=1)                              # (2*C, TB)

    logits = red[:C, :]                      # (C, TB) attention logits
    pref = red[C:, :]                        # (C, TB) preferences

    # Softmax over the component axis (sublane reductions over C rows).
    m = jnp.max(logits, axis=0, keepdims=True)               # (1, TB)
    e = jnp.exp(logits - m)
    denom = jnp.sum(e, axis=0, keepdims=True)
    # Exact divide for tight parity; pl.reciprocal(denom, approx=True) is a
    # free EUP-slot alternative when bit-tight parity is not required.
    att = e / denom

    wp = jnp.sum(att * pref, axis=0, keepdims=True)          # (1, TB)

    # Lane-dense store.
    o_ref[...] = wp + bias_ref[...]


def fuse_mixture_params(params, matmul_dtype=jnp.bfloat16):
    """One-time parameter preparation, hoisted out of the per-call path:
    fuse the attention/taste projections into a single (2*C*D, D) weight and
    cast the MXU-path tensors to bf16 (halves HBM traffic, doubles MXU rate)."""
    w_ta = jnp.concatenate([params["attention_w"], params["taste_w"]], axis=0)
    return {
        "user_embeddings": params["user_embeddings"].astype(matmul_dtype),
        "item_embeddings": params["item_embeddings"].astype(matmul_dtype),
        "user_biases": params["user_biases"].astype(jnp.float32),
        "item_biases": params["item_biases"].astype(jnp.float32),
        "fc1_w": params["fc1_w"].astype(matmul_dtype),
        "fc2_w": params["fc2_w"].astype(matmul_dtype),
        "w_ta": w_ta.astype(matmul_dtype),
    }


def _pick_batch_tile(batch_size):
    # Large tiles amortize the ~0.35 us/grid-step pipeline overhead and widen
    # every DMA and the (1, TB) store; cap so the ("parallel",) batch grid
    # keeps >= 2 steps when the batch allows it (v7x: 2 TensorCores/chip).
    tb = 1024
    while tb > 128 and batch_size <= tb:
        tb //= 2
    return tb


def nonlinear_mixture_net_forward(user_ids, item_ids, fused, num_components,
                                  *, batch_tile=None):
    """`fused` is the output of fuse_mixture_params (weights in PyTorch
    (out_features, in_features) layout, bf16 MXU-path tensors)."""
    D = fused["user_embeddings"].shape[1]
    C = num_components
    B = user_ids.shape[0]
    TB = batch_tile if batch_tile is not None else _pick_batch_tile(B)
    Bp = pl.cdiv(B, TB) * TB
    pad = Bp - B

    # Pad ids with 0 (a valid row): padded rows compute finite garbage that is
    # sliced off below.
    uid = jnp.pad(user_ids, (0, pad))
    iid = jnp.pad(item_ids, (0, pad))

    # Embedding gathers + layout plumbing (batch -> lane axis) in plain JAX.
    # Tables are already bf16, so the materialized (D, Bp) round trip is half
    # the f32 cost.
    # TODO(synk): at production table/batch sizes move these gathers in-kernel
    # via PrefetchScalarGridSpec (ids as scalar-prefetch args) + manual row DMA
    # to avoid the extra HBM round-trip entirely.
    u_t = fused["user_embeddings"][uid].T            # (D, Bp) bf16
    it_t = fused["item_embeddings"][iid].T           # (D, Bp) bf16
    bias = (fused["user_biases"][uid, 0] +
            fused["item_biases"][iid, 0])[None, :]   # (1, Bp) f32, lane-dense

    grid = (Bp // TB,)
    out = pl.pallas_call(
        functools.partial(_mixture_kernel, C),
        out_shape=jax.ShapeDtypeStruct((1, Bp), jnp.float32),
        grid=grid,
        in_specs=[
            pl.BlockSpec((D, TB), lambda i: (0, i)),         # u_t
            pl.BlockSpec((D, TB), lambda i: (0, i)),         # it_t
            # Weights use constant index_maps -> resident across the grid.
            # TODO(synk): at production C*D consider pipeline_mode=
            # pl.Buffered(1) on these to halve their VMEM under v7x's 64 MiB.
            pl.BlockSpec((D, D), lambda i: (0, 0)),          # fc1_w
            pl.BlockSpec((D, D), lambda i: (0, 0)),          # fc2_w
            pl.BlockSpec((2 * C * D, D), lambda i: (0, 0)),  # fused w_ta
            pl.BlockSpec((1, TB), lambda i: (0, i)),         # fused bias
        ],
        out_specs=pl.BlockSpec((1, TB), lambda i: (0, i)),
        compiler_params=pltpu.CompilerParams(
            dimension_semantics=("parallel",),
            vmem_limit_bytes=32 * 1024 * 1024),
    )(u_t, it_t, fused["fc1_w"], fused["fc2_w"], fused["w_ta"], bias)

    return out[0, :B]                                        # (B,)


def _reference_forward(user_ids, item_ids, params, num_components,
                       matmul_dtype=jnp.float32):
    """Pure-JAX reference.  With matmul_dtype=bf16 it mirrors the kernel's
    numerics (bf16 MXU operands, f32 accumulation, f32 elementwise)."""
    f32 = jnp.float32
    cast = lambda x: x.astype(matmul_dtype)
    C = num_components
    u = cast(params["user_embeddings"][user_ids])
    it = params["item_embeddings"][item_ids].astype(matmul_dtype).astype(f32)
    B, D = u.shape
    h = jax.nn.relu(jnp.dot(u, cast(params["fc1_w"]).T,
                            preferred_element_type=f32))
    h = jax.nn.relu(jnp.dot(cast(h), cast(params["fc2_w"]).T,
                            preferred_element_type=f32))
    tastes = jnp.dot(cast(h), cast(params["taste_w"]).T,
                     preferred_element_type=f32).reshape(B, C, D)
    attnp = jnp.dot(cast(h), cast(params["attention_w"]).T,
                    preferred_element_type=f32).reshape(B, C, D)
    it3 = it[:, None, :]
    attention = jax.nn.softmax((attnp * it3).sum(2), axis=1)
    preference = (tastes * it3).sum(2)
    wp = (attention * preference).sum(1)
    return wp + params["user_biases"][user_ids][:, 0] + \
        params["item_biases"][item_ids][:, 0]


if __name__ == "__main__":
    NUM_USERS = 10
    NUM_ITEMS = 12
    EMBEDDING_DIM = 32
    NUM_COMPONENTS = 4
    BATCH = 200          # non-multiple of the batch tile -> exercises padding
                         # and a 2-step ("parallel",) grid

    key = jax.random.PRNGKey(0)
    k_ue, k_ie, k_w1, k_w2, k_wt, k_wa, k_uid, k_iid = jax.random.split(key, 8)

    params = {
        "user_embeddings": 0.1 * jax.random.normal(
            k_ue, (NUM_USERS, EMBEDDING_DIM), jnp.float32),
        "item_embeddings": 0.1 * jax.random.normal(
            k_ie, (NUM_ITEMS, EMBEDDING_DIM), jnp.float32),
        # ZeroEmbedding -> zeros.
        "user_biases": jnp.zeros((NUM_USERS, 1), jnp.float32),
        "item_biases": jnp.zeros((NUM_ITEMS, 1), jnp.float32),
        # Linear weights in PyTorch (out_features, in_features) layout.
        "fc1_w": 0.1 * jax.random.normal(
            k_w1, (EMBEDDING_DIM, EMBEDDING_DIM), jnp.float32),
        "fc2_w": 0.1 * jax.random.normal(
            k_w2, (EMBEDDING_DIM, EMBEDDING_DIM), jnp.float32),
        "taste_w": 0.1 * jax.random.normal(
            k_wt, (EMBEDDING_DIM * NUM_COMPONENTS, EMBEDDING_DIM), jnp.float32),
        "attention_w": 0.1 * jax.random.normal(
            k_wa, (EMBEDDING_DIM * NUM_COMPONENTS, EMBEDDING_DIM), jnp.float32),
    }

    user_ids = jax.random.randint(k_uid, (BATCH,), 0, NUM_USERS)
    item_ids = jax.random.randint(k_iid, (BATCH,), 0, NUM_ITEMS)

    # One-time parameter fusion / bf16 cast (outside the per-call path).
    fused = fuse_mixture_params(params)

    out = nonlinear_mixture_net_forward(user_ids, item_ids, fused,
                                        NUM_COMPONENTS)
    out = jax.block_until_ready(out)
    assert out.shape == (BATCH,)

    # Tight check vs. a numerics-matched (bf16-MXU) reference.
    ref_bf16 = _reference_forward(user_ids, item_ids, params, NUM_COMPONENTS,
                                  matmul_dtype=jnp.bfloat16)
    assert jnp.allclose(out, ref_bf16, atol=1e-4, rtol=1e-3), (out, ref_bf16)

    # Semantic check vs. the pure-f32 reference (tolerance sized for bf16).
    ref_f32 = _reference_forward(user_ids, item_ids, params, NUM_COMPONENTS)
    assert jnp.allclose(out, ref_f32, atol=3e-3, rtol=3e-2), (out, ref_f32)

    # Exercise an explicit larger tile (single-step grid + heavier padding).
    out2 = nonlinear_mixture_net_forward(user_ids, item_ids, fused,
                                         NUM_COMPONENTS, batch_tile=512)
    out2 = jax.block_until_ready(out2)
    assert jnp.allclose(out2, ref_bf16, atol=1e-4, rtol=1e-3), (out2, ref_bf16)

    print("KERNEL_OK")
</pallas_src>

<mosaic_0001>
module attributes {stable_mosaic.version = 11 : i64} {
  func.func @_mixture_kernel(%arg0: i32, %arg1: memref<32x128xbf16, #tpu.memory_space<vmem>>, %arg2: memref<32x128xbf16, #tpu.memory_space<vmem>>, %arg3: memref<32x32xbf16, #tpu.memory_space<vmem>>, %arg4: memref<32x32xbf16, #tpu.memory_space<vmem>>, %arg5: memref<256x32xbf16, #tpu.memory_space<vmem>>, %arg6: memref<1x128xf32, #tpu.memory_space<vmem>>, %arg7: memref<1x128xf32, #tpu.memory_space<vmem>>) attributes {dimension_semantics = [#tpu.dimension_semantics<parallel>], iteration_bounds = array<i64: 2>, scalar_prefetch = 0 : i64, scratch_operands = 0 : i64, tpu.core_type = #tpu.core_type<tc>, window_params = [{transform_indices = @transform_0, window_bounds = array<i64: 32, 128>}, {transform_indices = @transform_1, window_bounds = array<i64: 32, 128>}, {pipeline_mode = #tpu.pipeline_mode<synchronous>, transform_indices = @transform_2, window_bounds = array<i64: 32, 32>}, {pipeline_mode = #tpu.pipeline_mode<synchronous>, transform_indices = @transform_3, window_bounds = array<i64: 32, 32>}, {pipeline_mode = #tpu.pipeline_mode<synchronous>, transform_indices = @transform_4, window_bounds = array<i64: 256, 32>}, {transform_indices = @transform_5, window_bounds = array<i64: 1, 128>}, {transform_indices = @transform_6, window_bounds = array<i64: 1, 128>}]} {
    %c0 = arith.constant 0 : index
    %c0_0 = arith.constant 0 : index
    %0 = vector.load %arg1[%c0, %c0_0] : memref<32x128xbf16, #tpu.memory_space<vmem>>, vector<32x128xbf16>
    %c0_1 = arith.constant 0 : index
    %c0_2 = arith.constant 0 : index
    %1 = vector.load %arg3[%c0_1, %c0_2] : memref<32x32xbf16, #tpu.memory_space<vmem>>, vector<32x32xbf16>
    %cst = arith.constant dense<0.000000e+00> : vector<32x128xf32>
    %2 = tpu.matmul %1, %0, %cst {dimension_numbers = #tpu.dot_dimension_numbers<[1], [0], [0], [1], [0, 0, 1, 1], [], []>} : vector<32x32xbf16>, vector<32x128xbf16>, vector<32x128xf32> -> vector<32x128xf32>
    %cst_3 = arith.constant 0.000000e+00 : f32
    %3 = vector.broadcast %cst_3 : f32 to vector<32x128xf32>
    %4 = arith.maximumf %2, %3 : vector<32x128xf32>
    %c0_4 = arith.constant 0 : index
    %c0_5 = arith.constant 0 : index
    %5 = vector.load %arg4[%c0_4, %c0_5] : memref<32x32xbf16, #tpu.memory_space<vmem>>, vector<32x32xbf16>
    %6 = arith.truncf %4 : vector<32x128xf32> to vector<32x128xbf16>
    %cst_6 = arith.constant dense<0.000000e+00> : vector<32x128xf32>
    %7 = tpu.matmul %5, %6, %cst_6 {dimension_numbers = #tpu.dot_dimension_numbers<[1], [0], [0], [1], [0, 0, 1, 1], [], []>} : vector<32x32xbf16>, vector<32x128xbf16>, vector<32x128xf32> -> vector<32x128xf32>
    %cst_7 = arith.constant 0.000000e+00 : f32
    %8 = vector.broadcast %cst_7 : f32 to vector<32x128xf32>
    %9 = arith.maximumf %7, %8 : vector<32x128xf32>
    %c0_8 = arith.constant 0 : index
    %c0_9 = arith.constant 0 : index
    %10 = vector.load %arg5[%c0_8, %c0_9] : memref<256x32xbf16, #tpu.memory_space<vmem>>, vector<256x32xbf16>
    %11 = arith.truncf %9 : vector<32x128xf32> to vector<32x128xbf16>
    %cst_10 = arith.constant dense<0.000000e+00> : vector<256x128xf32>
    %12 = tpu.matmul %10, %11, %cst_10 {dimension_numbers = #tpu.dot_dimension_numbers<[1], [0], [0], [1], [0, 0, 1, 1], [], []>} : vector<256x32xbf16>, vector<32x128xbf16>, vector<256x128xf32> -> vector<256x128xf32>
    %c0_11 = arith.constant 0 : index
    %c0_12 = arith.constant 0 : index
    %13 = vector.load %arg2[%c0_11, %c0_12] : memref<32x128xbf16, #tpu.memory_space<vmem>>, vector<32x128xbf16>
    %14 = arith.extf %13 : vector<32x128xbf16> to vector<32x128xf32>
    %15 = vector.shape_cast %12 : vector<256x128xf32> to vector<8x32x128xf32>
    %16 = vector.shape_cast %14 : vector<32x128xf32> to vector<1x32x128xf32>
    %17 = vector.broadcast %16 : vector<1x32x128xf32> to vector<8x32x128xf32>
    %18 = arith.mulf %15, %17 : vector<8x32x128xf32>
    %cst_13 = arith.constant dense<0.000000e+00> : vector<8x128xf32>
    %19 = vector.multi_reduction <add>, %18, %cst_13 [1] : vector<8x32x128xf32> to vector<8x128xf32>
    %20 = vector.extract_strided_slice %19 {offsets = [0, 0], sizes = [4, 128], strides = [1, 1]} : vector<8x128xf32> to vector<4x128xf32>
    %21 = vector.extract_strided_slice %19 {offsets = [4, 0], sizes = [4, 128], strides = [1, 1]} : vector<8x128xf32> to vector<4x128xf32>
    %cst_14 = arith.constant dense<0xFF800000> : vector<128xf32>
    %22 = vector.multi_reduction <maximumf>, %20, %cst_14 [0] : vector<4x128xf32> to vector<128xf32>
    %23 = vector.shape_cast %22 : vector<128xf32> to vector<1x128xf32>
    %24 = vector.broadcast %23 : vector<1x128xf32> to vector<4x128xf32>
    %25 = arith.subf %20, %24 : vector<4x128xf32>
    %26 = math.exp %25 : vector<4x128xf32>
    %cst_15 = arith.constant dense<0.000000e+00> : vector<128xf32>
    %27 = vector.multi_reduction <add>, %26, %cst_15 [0] : vector<4x128xf32> to vector<128xf32>
    %28 = vector.shape_cast %27 : vector<128xf32> to vector<1x128xf32>
    %29 = vector.broadcast %28 : vector<1x128xf32> to vector<4x128xf32>
    %30 = arith.divf %26, %29 : vector<4x128xf32>
    %31 = arith.mulf %30, %21 : vector<4x128xf32>
    %cst_16 = arith.constant dense<0.000000e+00> : vector<128xf32>
    %32 = vector.multi_reduction <add>, %31, %cst_16 [0] : vector<4x128xf32> to vector<128xf32>
    %33 = vector.shape_cast %32 : vector<128xf32> to vector<1x128xf32>
    %c0_17 = arith.constant 0 : index
    %c0_18 = arith.constant 0 : index
    %34 = vector.load %arg6[%c0_17, %c0_18] : memref<1x128xf32, #tpu.memory_space<vmem>>, vector<1x128xf32>
    %35 = arith.addf %33, %34 : vector<1x128xf32>
    %c0_19 = arith.constant 0 : index
    %c0_20 = arith.constant 0 : index
    %36 = vector.load %arg7[%c0_19, %c0_20] : memref<1x128xf32, #tpu.memory_space<vmem>>, vector<1x128xf32>
    tpu.vector_store %arg7[%c0_19, %c0_20], %35 {strides = array<i32>} : memref<1x128xf32, #tpu.memory_space<vmem>>, vector<1x128xf32>,
    return
  }
  func.func @transform_0(%arg0: i32) -> (i32, i32) {
    %c0_i32 = arith.constant 0 : i32
    %c0_i32_0 = arith.constant 0 : i32
    return %c0_i32, %arg0 : i32, i32
  }
  func.func @transform_1(%arg0: i32) -> (i32, i32) {
    %c0_i32 = arith.constant 0 : i32
    %c0_i32_0 = arith.constant 0 : i32
    return %c0_i32, %arg0 : i32, i32
  }
  func.func @transform_2(%arg0: i32) -> (i32, i32) {
    %c0_i32 = arith.constant 0 : i32
    %c0_i32_0 = arith.constant 0 : i32
    %c0_i32_1 = arith.constant 0 : i32
    return %c0_i32, %c0_i32_0 : i32, i32
  }
  func.func @transform_3(%arg0: i32) -> (i32, i32) {
    %c0_i32 = arith.constant 0 : i32
    %c0_i32_0 = arith.constant 0 : i32
    %c0_i32_1 = arith.constant 0 : i32
    return %c0_i32, %c0_i32_0 : i32, i32
  }
  func.func @transform_4(%arg0: i32) -> (i32, i32) {
    %c0_i32 = arith.constant 0 : i32
    %c0_i32_0 = arith.constant 0 : i32
    %c0_i32_1 = arith.constant 0 : i32
    return %c0_i32, %c0_i32_0 : i32, i32
  }
  func.func @transform_5(%arg0: i32) -> (i32, i32) {
    %c0_i32 = arith.constant 0 : i32
    %c0_i32_0 = arith.constant 0 : i32
    return %c0_i32, %arg0 : i32, i32
  }
  func.func @transform_6(%arg0: i32) -> (i32, i32) {
    %c0_i32 = arith.constant 0 : i32
    %c0_i32_0 = arith.constant 0 : i32
    return %c0_i32, %arg0 : i32, i32
  }
}

</mosaic_0001>

<llo_original>
// kernel: tpu_custom_call.1
$region0: #{tpu_custom_call.1}
  #allocation0 [shape = 'u32[]', space=smem, size = 0x4, offset = 0x4, fixed_abs, tag = 'smem constant byte address 0x4 - core index']
  #allocation1 [shape = 'u32[144,128]{1,0:T(1,128)}', space=vmem, size = 0x12000, scoped, tag = 'internal scratch']
  %s0 = inlined_call_operand.vmem [shape: bf16[32,256], index: 0, kind: input, shape index: {}]
  %s1 = inlined_call_operand.vmem [shape: bf16[32,256], index: 1, kind: input, shape index: {}]
  %s2 = inlined_call_operand.vmem [shape: bf16[32,32], index: 2, kind: input, shape index: {}]
  %s3 = inlined_call_operand.vmem [shape: bf16[32,32], index: 3, kind: input, shape index: {}]
  %s4 = inlined_call_operand.vmem [shape: bf16[256,32], index: 4, kind: input, shape index: {}]
  %s5 = inlined_call_operand.vmem [shape: f32[1,256], index: 5, kind: input, shape index: {}]
  %s6 = inlined_call_operand.hbm [shape: f32[1,256], index: 6, kind: output, shape index: {}]
  %s7 = sld [smem:[#allocation0]]
  $region139: #{tpu_custom_call.1} parent=0
    _
  %s9 = ssub.s32 1, %s7
  %s10 = scalar_select 0, %s9, %s7
  $region1: #{tpu_custom_call.1} parent=0
    #allocation2 [shape = 'u8[16384]{0}', space=vmem, size = 0x4000, scoped, tag = 'input window, operand 0']
    #allocation3 [shape = 'u8[16384]{0}', space=vmem, size = 0x4000, scoped, tag = 'input window, operand 1']
    #allocation4 [shape = 'u8[1024]{0}', space=vmem, size = 0x400, scoped, tag = 'output window, operand 0']
    #allocation5 [shape = 's32[2]{0}', space=sflag, size = 0x8, scoped, tag = 'scoped memory for tpu_custom_call.1']
    %11 = vsyncpa [#allocation5], 0
    %s12 = scalar_lea.sflag [#allocation5], 1
    %13 = vsyncpa %s12, 0
    loop: start=0, step=1, limit=4
    $region2: #{tpu_custom_call.1} parent=1 // loop_pre_header
      _
    $region3: #{tpu_custom_call.1} parent=1 // loop_header
      %s15 = sphi 0, %s19
      %p16 = scmp.ge.s32.totalorder %s15, 4
      %s25 = sphi 0, %s27
      %s28 = sphi 0, %s25
      %s29 = sphi 0, %s28
      %s45 = sphi 0, %s29
      %s51 = sphi 0, %s53
      %s54 = sphi 0, %s51
      %s55 = sphi 0, %s54
      %s71 = sphi 0, %s55
      %s75 = sphi 0, %s75
      %s77 = sphi 0, %s75
      %s78 = sphi 0, %s77
      %s92 = sphi 0, %s78
      %s96 = sphi 0, %s96
      %s98 = sphi 0, %s96
      %s99 = sphi 0, %s98
      %s113 = sphi 0, %s99
      %s117 = sphi 0, %s117
      %s119 = sphi 0, %s117
      %s120 = sphi 0, %s119
      %s134 = sphi 0, %s120
      %s140 = sphi 0, %s142
      %s143 = sphi 0, %s140
      %s144 = sphi 0, %s143
      %s160 = sphi 0, %s144
      %s166 = sphi 0, %s168
      %s169 = sphi 0, %s166
      %s170 = sphi 0, %s169
      %s186 = sphi 0, %s170
    $region4: #{tpu_custom_call.1} parent=1 // loop_header_branch
      %18 = sbr.rel (%p16) target = $region8
    $region5: #{tpu_custom_call.1} parent=1 // loop_body
      %s20 = ssub.s32 %s15, 1
      %s21 = ssub.s32 %s15, 2
      %s22 = sadd.s32 %s15, 1
      %s23 = ssub.s32 %s15, %s22
      %p24 = scmp.eq.s32.totalorder %s23, 0
      %s26 = sadd.s32 %s25, 1
      %s27 = scalar_select %p24, %s25, %s26
      %p30 = pneg %p24
      %p31 = scmp.eq.s32.totalorder %s15, 1
      %p32 = por %p30, %p31
      %p33 = scmp.ne.s32.totalorder %s25, %s28
      %p34 = scmp.eq.s32.totalorder %s15, 0
      %p35 = por %p33, %p34
      %p36 = scmp.ne.s32.totalorder %s25, %s28
      %p37 = scmp.eq.s32.totalorder %s20, 1
      %p38 = por %p36, %p37
      %p39 = scmp.ne.s32.totalorder %s28, %s29
      %p40 = scmp.eq.s32.totalorder %s20, 0
      %p41 = por %p39, %p40
      %p42 = scmp.ne.s32.totalorder %s28, %s29
      %p43 = scmp.eq.s32.totalorder %s21, 1
      %p44 = por %p42, %p43
      %p46 = scmp.ne.s32.totalorder %s29, %s45
      %p47 = scmp.eq.s32.totalorder %s21, 0
      %p48 = por %p46, %p47
      %s49 = ssub.s32 %s15, %s22
      %p50 = scmp.eq.s32.totalorder %s49, 0
      %s52 = sadd.s32 %s51, 1
      %s53 = scalar_select %p50, %s51, %s52
      %p56 = pneg %p50
      %p57 = scmp.eq.s32.totalorder %s15, 1
      %p58 = por %p56, %p57
      %p59 = scmp.ne.s32.totalorder %s51, %s54
      %p60 = scmp.eq.s32.totalorder %s15, 0
      %p61 = por %p59, %p60
      %p62 = scmp.ne.s32.totalorder %s51, %s54
      %p63 = scmp.eq.s32.totalorder %s20, 1
      %p64 = por %p62, %p63
      %p65 = scmp.ne.s32.totalorder %s54, %s55
      %p66 = scmp.eq.s32.totalorder %s20, 0
      %p67 = por %p65, %p66
      %p68 = scmp.ne.s32.totalorder %s54, %s55
      %p69 = scmp.eq.s32.totalorder %s21, 1
      %p70 = por %p68, %p69
      %p72 = scmp.ne.s32.totalorder %s55, %s71
      %p73 = scmp.eq.s32.totalorder %s21, 0
      %p74 = por %p72, %p73
      %s76 = sadd.s32 %s75, 1
      %p79 = scmp.eq.s32.totalorder %s15, 1
      %p80 = scmp.ne.s32.totalorder %s75, %s77
      %p81 = scmp.eq.s32.totalorder %s15, 0
      %p82 = por %p80, %p81
      %p83 = scmp.ne.s32.totalorder %s75, %s77
      %p84 = scmp.eq.s32.totalorder %s20, 1
      %p85 = por %p83, %p84
      %p86 = scmp.ne.s32.totalorder %s77, %s78
      %p87 = scmp.eq.s32.totalorder %s20, 0
      %p88 = por %p86, %p87
      %p89 = scmp.ne.s32.totalorder %s77, %s78
      %p90 = scmp.eq.s32.totalorder %s21, 1
      %p91 = por %p89, %p90
      %p93 = scmp.ne.s32.totalorder %s78, %s92
      %p94 = scmp.eq.s32.totalorder %s21, 0
      %p95 = por %p93, %p94
      %s97 = sadd.s32 %s96, 1
      %p100 = scmp.eq.s32.totalorder %s15, 1
      %p101 = scmp.ne.s32.totalorder %s96, %s98
      %p102 = scmp.eq.s32.totalorder %s15, 0
      %p103 = por %p101, %p102
      %p104 = scmp.ne.s32.totalorder %s96, %s98
      %p105 = scmp.eq.s32.totalorder %s20, 1
      %p106 = por %p104, %p105
      %p107 = scmp.ne.s32.totalorder %s98, %s99
      %p108 = scmp.eq.s32.totalorder %s20, 0
      %p109 = por %p107, %p108
      %p110 = scmp.ne.s32.totalorder %s98, %s99
      %p111 = scmp.eq.s32.totalorder %s21, 1
      %p112 = por %p110, %p111
      %p114 = scmp.ne.s32.totalorder %s99, %s113
      %p115 = scmp.eq.s32.totalorder %s21, 0
      %p116 = por %p114, %p115
      %s118 = sadd.s32 %s117, 1
      %p121 = scmp.eq.s32.totalorder %s15, 1
      %p122 = scmp.ne.s32.totalorder %s117, %s119
      %p123 = scmp.eq.s32.totalorder %s15, 0
      %p124 = por %p122, %p123
      %p125 = scmp.ne.s32.totalorder %s117, %s119
      %p126 = scmp.eq.s32.totalorder %s20, 1
      %p127 = por %p125, %p126
      %p128 = scmp.ne.s32.totalorder %s119, %s120
      %p129 = scmp.eq.s32.totalorder %s20, 0
      %p130 = por %p128, %p129
      %p131 = scmp.ne.s32.totalorder %s119, %s120
      %p132 = scmp.eq.s32.totalorder %s21, 1
      %p133 = por %p131, %p132
      %p135 = scmp.ne.s32.totalorder %s120, %s134
      %p136 = scmp.eq.s32.totalorder %s21, 0
      %p137 = por %p135, %p136
      %s138 = ssub.s32 %s15, %s22
      %p139 = scmp.eq.s32.totalorder %s138, 0
      %s141 = sadd.s32 %s140, 1
      %s142 = scalar_select %p139, %s140, %s141
      %p145 = pneg %p139
      %p146 = scmp.eq.s32.totalorder %s15, 1
      %p147 = por %p145, %p146
      %p148 = scmp.ne.s32.totalorder %s140, %s143
      %p149 = scmp.eq.s32.totalorder %s15, 0
      %p150 = por %p148, %p149
      %p151 = scmp.ne.s32.totalorder %s140, %s143
      %p152 = scmp.eq.s32.totalorder %s20, 1
      %p153 = por %p151, %p152
      %p154 = scmp.ne.s32.totalorder %s143, %s144
      %p155 = scmp.eq.s32.totalorder %s20, 0
      %p156 = por %p154, %p155
      %p157 = scmp.ne.s32.totalorder %s143, %s144
      %p158 = scmp.eq.s32.totalorder %s21, 1
      %p159 = por %p157, %p158
      %p161 = scmp.ne.s32.totalorder %s144, %s160
      %p162 = scmp.eq.s32.totalorder %s21, 0
      %p163 = por %p161, %p162
      %s164 = ssub.s32 %s15, %s22
      %p165 = scmp.eq.s32.totalorder %s164, 0
      %s167 = sadd.s32 %s166, 1
      %s168 = scalar_select %p165, %s166, %s167
      %p171 = pneg %p165
      %p172 = scmp.eq.s32.totalorder %s15, 1
      %p173 = por %p171, %p172
      %p174 = scmp.ne.s32.totalorder %s166, %s169
      %p175 = scmp.eq.s32.totalorder %s15, 0
      %p176 = por %p174, %p175
      %p177 = scmp.ne.s32.totalorder %s166, %s169
      %p178 = scmp.eq.s32.totalorder %s20, 1
      %p179 = por %p177, %p178
      %p180 = scmp.ne.s32.totalorder %s169, %s170
      %p181 = scmp.eq.s32.totalorder %s20, 0
      %p182 = por %p180, %p181
      %p183 = scmp.ne.s32.totalorder %s169, %s170
      %p184 = scmp.eq.s32.totalorder %s21, 1
      %p185 = por %p183, %p184
      %p187 = scmp.ne.s32.totalorder %s170, %s186
      %p188 = scmp.eq.s32.totalorder %s21, 0
      %p189 = por %p187, %p188
      %p190 = scmp.le.s32.totalorder 1, %s15
      %p191 = scmp.lt.s32.totalorder %s15, 3
      %p192 = pnand %p190, %p191
      %p193 = pneg %p192
      // Predicated region
      $region9: #{tpu_custom_call.1} parent=5 // pred_check
        _
      $region10: #{tpu_custom_call.1} parent=5 // pred_check_branch
        %195 = sbr.rel (%p192) target = $region12
      $region11: #{tpu_custom_call.1} parent=5 // pred_region
        %s196 = ssub.s32 %s15, 1
        // Predicated region
        $region13: #{tpu_custom_call.1} parent=11 // pred_check
          %p197 = pneg %p88
        $region14: #{tpu_custom_call.1} parent=11 // pred_check_branch
          %199 = sbr.rel (%p197) target = $region16
        $region15: #{tpu_custom_call.1} parent=11 // pred_region
          _
        $region16: #{tpu_custom_call.1} parent=11 // pred_fallthru
          _
        // Predicated region
        $region17: #{tpu_custom_call.1} parent=11 // pred_check
          %p200 = pneg %p109
        $region18: #{tpu_custom_call.1} parent=11 // pred_check_branch
          %202 = sbr.rel (%p200) target = $region20
        $region19: #{tpu_custom_call.1} parent=11 // pred_region
          _
        $region20: #{tpu_custom_call.1} parent=11 // pred_fallthru
          _
        // Predicated region
        $region21: #{tpu_custom_call.1} parent=11 // pred_check
          %p203 = pneg %p130
        $region22: #{tpu_custom_call.1} parent=11 // pred_check_branch
          %205 = sbr.rel (%p203) target = $region24
        $region23: #{tpu_custom_call.1} parent=11 // pred_region
          _
        $region24: #{tpu_custom_call.1} parent=11 // pred_fallthru
          _
      $region12: #{tpu_custom_call.1} parent=5 // pred_fallthru
        _
      %p206 = scmp.lt.s32.totalorder %s15, 2
      // Predicated region
      $region25: #{tpu_custom_call.1} parent=5 // pred_check
        %p207 = pneg %p206
      $region26: #{tpu_custom_call.1} parent=5 // pred_check_branch
        %209 = sbr.rel (%p207) target = $region28
      $region27: #{tpu_custom_call.1} parent=5 // pred_region
        // Predicated region
        $region29: #{tpu_custom_call.1} parent=27 // pred_check
          %p210 = pneg %p35
        $region30: #{tpu_custom_call.1} parent=27 // pred_check_branch
          %212 = sbr.rel (%p210) target = $region32
        $region31: #{tpu_custom_call.1} parent=27 // pred_region
          %s213 = sand.u32 %s25, 1
          %s214 = sand.u32 %s25, 1
          %s215 = smul.addr %s214, 16
          %s216 = scalar_lea.vmem [#allocation2], %s215
          %s217 = smul.addr %s15, 4
          %s218 = scalar_lea.vmem %s0, %s217
          // Predicated region
          $region33: #{tpu_custom_call.1} parent=31 // pred_check
            _
          $region34: #{tpu_custom_call.1} parent=31 // pred_check_branch
            %220 = sbr.rel (0) target = $region36
          $region35: #{tpu_custom_call.1} parent=31 // pred_region
            // Predicated region
            $region37: #{tpu_custom_call.1} parent=35 // pred_check
              _
            $region38: #{tpu_custom_call.1} parent=35 // pred_check_branch
              %222 = sbr.rel target = $region40
            $region39: #{tpu_custom_call.1} parent=35 // pred_region
              // Predicated region
              $region52: #{tpu_custom_call.1} parent=39 // pred_check
                _
              $region53: #{tpu_custom_call.1} parent=39 // pred_check_branch
                %243 = sbr.rel (0) target = $region55
              $region54: #{tpu_custom_call.1} parent=39 // pred_region
                loop: start=0, step=1, limit=1
                $region56: #{tpu_custom_call.1} parent=54 // loop_pre_header
                  _
                $region57: #{tpu_custom_call.1} parent=54 // loop_header
                  %s245 = sphi 0, %s249
                  %p246 = scmp.ge.s32.totalorder %s245, 1
                  %s250 = sphi %s218, %s218
                  %s251 = sphi %s216, %s216
                $region58: #{tpu_custom_call.1} parent=54 // loop_header_branch
                  %248 = sbr.rel (%p246) target = $region62
                $region59: #{tpu_custom_call.1} parent=54 // loop_body
                  _
                $region60: #{tpu_custom_call.1} parent=54 // loop_footer
                  %s249 = sadd.s32 1, %s245
                $region61: #{tpu_custom_call.1} parent=54 // loop_footer_branch
                  %244 = sbr.rel target = $region57
                $region62: #{tpu_custom_call.1} parent=54 // loop_exit
                  _
                loop: start=0, step=1, limit=1
                $region63: #{tpu_custom_call.1} parent=54 // loop_pre_header
                  _
                $region64: #{tpu_custom_call.1} parent=54 // loop_header
                  %s254 = sphi 0, %s258
                  %p255 = scmp.ge.s32.totalorder %s254, 1
                  %s259 = sphi %s218, %s218
                  %s260 = sphi %s216, %s216
                $region65: #{tpu_custom_call.1} parent=54 // loop_header_branch
                  %257 = sbr.rel (%p255) target = $region69
                $region66: #{tpu_custom_call.1} parent=54 // loop_body
                  %v261 = vld [vmem:[%s259] sm:$0xf]
                  %262 = vst [vmem:[%s260] sm:$0xf] %v261
                  %v263 = vld [vmem:[%s259 + $0x8] sm:$0xf]
                  %264 = vst [vmem:[%s260 + $0x4] sm:$0xf] %v263
                  %v265 = vld [vmem:[%s259 + $0x10] sm:$0xf]
                  %266 = vst [vmem:[%s260 + $0x8] sm:$0xf] %v265
                  %v267 = vld [vmem:[%s259 + $0x18] sm:$0xf]
                  %268 = vst [vmem:[%s260 + $0xc] sm:$0xf] %v267
                $region67: #{tpu_custom_call.1} parent=54 // loop_footer
                  %s258 = sadd.s32 1, %s254
                $region68: #{tpu_custom_call.1} parent=54 // loop_footer_branch
                  %253 = sbr.rel target = $region64
                $region69: #{tpu_custom_call.1} parent=54 // loop_exit
                  _
              $region55: #{tpu_custom_call.1} parent=39 // pred_fallthru
                _
            $region40: #{tpu_custom_call.1} parent=35 // pred_fallthru
              _
            // Predicated region
            $region41: #{tpu_custom_call.1} parent=35 // pred_check
              _
            $region42: #{tpu_custom_call.1} parent=35 // pred_check_branch
              %224 = sbr.rel (0) target = $region44
            $region43: #{tpu_custom_call.1} parent=35 // pred_region
              loop: start=0, step=1, limit=1
              $region45: #{tpu_custom_call.1} parent=43 // loop_pre_header
                _
              $region46: #{tpu_custom_call.1} parent=43 // loop_header
                %s227 = sphi 0, %s231
                %p228 = scmp.ge.s32.totalorder %s227, 1
                %s232 = sphi %s218, %s218
                %s233 = sphi %s216, %s216
              $region47: #{tpu_custom_call.1} parent=43 // loop_header_branch
                %230 = sbr.rel (%p228) target = $region51
              $region48: #{tpu_custom_call.1} parent=43 // loop_body
                %v234 = vld [vmem:[%s232] sm:$0xf]
                %235 = vst [vmem:[%s233] sm:$0xf] %v234
                %v236 = vld [vmem:[%s232 + $0x8] sm:$0xf]
                %237 = vst [vmem:[%s233 + $0x4] sm:$0xf] %v236
                %v238 = vld [vmem:[%s232 + $0x10] sm:$0xf]
                %239 = vst [vmem:[%s233 + $0x8] sm:$0xf] %v238
                %v240 = vld [vmem:[%s232 + $0x18] sm:$0xf]
                %241 = vst [vmem:[%s233 + $0xc] sm:$0xf] %v240
              $region49: #{tpu_custom_call.1} parent=43 // loop_footer
                %s231 = sadd.s32 1, %s227
              $region50: #{tpu_custom_call.1} parent=43 // loop_footer_branch
                %226 = sbr.rel target = $region46
              $region51: #{tpu_custom_call.1} parent=43 // loop_exit
                _
            $region44: #{tpu_custom_call.1} parent=35 // pred_fallthru
              _
          $region36: #{tpu_custom_call.1} parent=31 // pred_fallthru
            _
          %269 = vnop
        $region32: #{tpu_custom_call.1} parent=27 // pred_fallthru
          _
        // Predicated region
        $region70: #{tpu_custom_call.1} parent=27 // pred_check
          %p270 = pneg %p61
        $region71: #{tpu_custom_call.1} parent=27 // pred_check_branch
          %272 = sbr.rel (%p270) target = $region73
        $region72: #{tpu_custom_call.1} parent=27 // pred_region
          %s273 = sand.u32 %s51, 1
          %s274 = sand.u32 %s51, 1
          %s275 = smul.addr %s274, 16
          %s276 = scalar_lea.vmem [#allocation3], %s275
          %s277 = smul.addr %s15, 4
          %s278 = scalar_lea.vmem %s1, %s277
          // Predicated region
          $region74: #{tpu_custom_call.1} parent=72 // pred_check
            _
          $region75: #{tpu_custom_call.1} parent=72 // pred_check_branch
            %280 = sbr.rel (0) target = $region77
          $region76: #{tpu_custom_call.1} parent=72 // pred_region
            // Predicated region
            $region78: #{tpu_custom_call.1} parent=76 // pred_check
              _
            $region79: #{tpu_custom_call.1} parent=76 // pred_check_branch
              %282 = sbr.rel target = $region81
            $region80: #{tpu_custom_call.1} parent=76 // pred_region
              // Predicated region
              $region93: #{tpu_custom_call.1} parent=80 // pred_check
                _
              $region94: #{tpu_custom_call.1} parent=80 // pred_check_branch
                %303 = sbr.rel (0) target = $region96
              $region95: #{tpu_custom_call.1} parent=80 // pred_region
                loop: start=0, step=1, limit=1
                $region97: #{tpu_custom_call.1} parent=95 // loop_pre_header
                  _
                $region98: #{tpu_custom_call.1} parent=95 // loop_header
                  %s305 = sphi 0, %s309
                  %p306 = scmp.ge.s32.totalorder %s305, 1
                  %s310 = sphi %s278, %s278
                  %s311 = sphi %s276, %s276
                $region99: #{tpu_custom_call.1} parent=95 // loop_header_branch
                  %308 = sbr.rel (%p306) target = $region103
                $region100: #{tpu_custom_call.1} parent=95 // loop_body
                  _
                $region101: #{tpu_custom_call.1} parent=95 // loop_footer
                  %s309 = sadd.s32 1, %s305
                $region102: #{tpu_custom_call.1} parent=95 // loop_footer_branch
                  %304 = sbr.rel target = $region98
                $region103: #{tpu_custom_call.1} parent=95 // loop_exit
                  _
                loop: start=0, step=1, limit=1
                $region104: #{tpu_custom_call.1} parent=95 // loop_pre_header
                  _
                $region105: #{tpu_custom_call.1} parent=95 // loop_header
                  %s314 = sphi 0, %s318
                  %p315 = scmp.ge.s32.totalorder %s314, 1
                  %s319 = sphi %s278, %s278
                  %s320 = sphi %s276, %s276
                $region106: #{tpu_custom_call.1} parent=95 // loop_header_branch
                  %317 = sbr.rel (%p315) target = $region110
                $region107: #{tpu_custom_call.1} parent=95 // loop_body
                  %v321 = vld [vmem:[%s319] sm:$0xf]
                  %322 = vst [vmem:[%s320] sm:$0xf] %v321
                  %v323 = vld [vmem:[%s319 + $0x8] sm:$0xf]
                  %324 = vst [vmem:[%s320 + $0x4] sm:$0xf] %v323
                  %v325 = vld [vmem:[%s319 + $0x10] sm:$0xf]
                  %326 = vst [vmem:[%s320 + $0x8] sm:$0xf] %v325
                  %v327 = vld [vmem:[%s319 + $0x18] sm:$0xf]
                  %328 = vst [vmem:[%s320 + $0xc] sm:$0xf] %v327
                $region108: #{tpu_custom_call.1} parent=95 // loop_footer
                  %s318 = sadd.s32 1, %s314
                $region109: #{tpu_custom_call.1} parent=95 // loop_footer_branch
                  %313 = sbr.rel target = $region105
                $region110: #{tpu_custom_call.1} parent=95 // loop_exit
                  _
              $region96: #{tpu_custom_call.1} parent=80 // pred_fallthru
                _
            $region81: #{tpu_custom_call.1} parent=76 // pred_fallthru
              _
            // Predicated region
            $region82: #{tpu_custom_call.1} parent=76 // pred_check
              _
            $region83: #{tpu_custom_call.1} parent=76 // pred_check_branch
              %284 = sbr.rel (0) target = $region85
            $region84: #{tpu_custom_call.1} parent=76 // pred_region
              loop: start=0, step=1, limit=1
              $region86: #{tpu_custom_call.1} parent=84 // loop_pre_header
                _
              $region87: #{tpu_custom_call.1} parent=84 // loop_header
                %s287 = sphi 0, %s291
                %p288 = scmp.ge.s32.totalorder %s287, 1
                %s292 = sphi %s278, %s278
                %s293 = sphi %s276, %s276
              $region88: #{tpu_custom_call.1} parent=84 // loop_header_branch
                %290 = sbr.rel (%p288) target = $region92
              $region89: #{tpu_custom_call.1} parent=84 // loop_body
                %v294 = vld [vmem:[%s292] sm:$0xf]
                %295 = vst [vmem:[%s293] sm:$0xf] %v294
                %v296 = vld [vmem:[%s292 + $0x8] sm:$0xf]
                %297 = vst [vmem:[%s293 + $0x4] sm:$0xf] %v296
                %v298 = vld [vmem:[%s292 + $0x10] sm:$0xf]
                %299 = vst [vmem:[%s293 + $0x8] sm:$0xf] %v298
                %v300 = vld [vmem:[%s292 + $0x18] sm:$0xf]
                %301 = vst [vmem:[%s293 + $0xc] sm:$0xf] %v300
              $region90: #{tpu_custom_call.1} parent=84 // loop_footer
                %s291 = sadd.s32 1, %s287
              $region91: #{tpu_custom_call.1} parent=84 // loop_footer_branch
                %286 = sbr.rel target = $region87
              $region92: #{tpu_custom_call.1} parent=84 // loop_exit
                _
            $region85: #{tpu_custom_call.1} parent=76 // pred_fallthru
              _
          $region77: #{tpu_custom_call.1} parent=72 // pred_fallthru
            _
          %329 = vnop
        $region73: #{tpu_custom_call.1} parent=27 // pred_fallthru
          _
        // Predicated region
        $region111: #{tpu_custom_call.1} parent=27 // pred_check
          %p330 = pneg %p150
        $region112: #{tpu_custom_call.1} parent=27 // pred_check_branch
          %332 = sbr.rel (%p330) target = $region114
        $region113: #{tpu_custom_call.1} parent=27 // pred_region
          %p333 = scmp.lt.s32.totalorder %s15, 1
          %s334 = scalar_select %p333, %s15, 1
          %s335 = scalar_lea.vmem %s5, %s334
        $region114: #{tpu_custom_call.1} parent=27 // pred_fallthru
          _
      $region28: #{tpu_custom_call.1} parent=5 // pred_fallthru
        _
      %p336 = scmp.le.s32.totalorder 1, %s15
      %p337 = scmp.lt.s32.totalorder %s15, 3
      %p338 = pnand %p336, %p337
      %p339 = pneg %p338
      // Predicated region
      $region115: #{tpu_custom_call.1} parent=5 // pred_check
        _
      $region116: #{tpu_custom_call.1} parent=5 // pred_check_branch
        %341 = sbr.rel (%p338) target = $region118
      $region117: #{tpu_custom_call.1} parent=5 // pred_region
        %s342 = ssub.s32 %s15, 1
        %s343 = sand.u32 %s28, 1
        %s344 = sand.u32 %s28, 1
        %s345 = smul.addr %s344, 16
        %s346 = scalar_lea.vmem [#allocation2], %s345
        // Predicated region
        $region119: #{tpu_custom_call.1} parent=117 // pred_check
          %p347 = pneg %p41
        $region120: #{tpu_custom_call.1} parent=117 // pred_check_branch
          %349 = sbr.rel (%p347) target = $region122
        $region121: #{tpu_custom_call.1} parent=117 // pred_region
          _
        $region122: #{tpu_custom_call.1} parent=117 // pred_fallthru
          _
        %s350 = sand.u32 %s54, 1
        %s351 = sand.u32 %s54, 1
        %s352 = smul.addr %s351, 16
        %s353 = scalar_lea.vmem [#allocation3], %s352
        // Predicated region
        $region123: #{tpu_custom_call.1} parent=117 // pred_check
          %p354 = pneg %p67
        $region124: #{tpu_custom_call.1} parent=117 // pred_check_branch
          %356 = sbr.rel (%p354) target = $region126
        $region125: #{tpu_custom_call.1} parent=117 // pred_region
          _
        $region126: #{tpu_custom_call.1} parent=117 // pred_fallthru
          _
        %s357 = sand.u32 %s28, 1
        %s358 = sand.u32 %s28, 1
        %s359 = smul.addr %s358, 16
        %s360 = scalar_lea.vmem [#allocation2], %s359
        %p361 = pneg %p41
        %p362 = pneg %p38
        %s363 = sand.u32 %s54, 1
        %s364 = sand.u32 %s54, 1
        %s365 = smul.addr %s364, 16
        %s366 = scalar_lea.vmem [#allocation3], %s365
        %p367 = pneg %p67
        %p368 = pneg %p64
        %p369 = pneg %p88
        %p370 = pneg %p85
        %p371 = pneg %p109
        %p372 = pneg %p106
        %p373 = pneg %p130
        %p374 = pneg %p127
        %p375 = scmp.lt.s32.totalorder %s20, 1
        %s376 = scalar_select %p375, %s20, 1
        %s377 = scalar_lea.vmem %s5, %s376
        %p378 = pneg %p156
        %p379 = pneg %p153
        %p380 = pneg %p182
        %p381 = pneg %p179
        %s382 = sand.u32 %s169, 1
        %s383 = scalar_lea.sflag [#allocation5], %s382
        %s384 = sand.u32 %s169, 1
        %s385 = scalar_lea.vmem [#allocation4], %s384
        %p386 = scmp.lt.s32.totalorder %s20, 1
        %s387 = scalar_select %p386, %s20, 1
        %s388 = scalar_lea.vmem %s5, %s387
        %v390 = vld [vmem:[%s346] sm:$0xf]
        %v391 = vld [vmem:[%s346 + $0x4] sm:$0xf]
        %v392 = vld [vmem:[%s346 + $0x8] sm:$0xf]
        %v393 = vld [vmem:[%s346 + $0xc] sm:$0xf]
        %v394 = vld [vmem:[%s2] sm:$0xf]
        %v395 = vld [vmem:[%s2 + $0x4] sm:$0xf]
        %v396 = vld [vmem:[%s2 + $0x8] sm:$0xf]
        %v397 = vld [vmem:[%s2 + $0xc] sm:$0xf]
        %v402 = vunpack.c.l.b16 %v394
        %v403 = vunpack.c.l.b16 %v395
        %v404 = vunpack.c.l.b16 %v396
        %v405 = vunpack.c.l.b16 %v397
        %v406 = vpack.c.b16 %v403, %v402
        %v407 = vpack.c.b16 %v405, %v404
        %v412 = vunpack.c.l.b16 %v390
        %v413 = vunpack.c.l.b16 %v391
        %v414 = vunpack.c.l.b16 %v392
        %v415 = vunpack.c.l.b16 %v393
        %v416 = vpack.c.b16 %v413, %v412
        %v417 = vpack.c.b16 %v415, %v414
        %vm420 = vcmask 261120
        %v422 = vsel %vm420, %v406, 0
        %v425 = vsel %vm420, %v407, 0
        %427 = vmatprep.subr.bf16.mxu0 0
        %428 = vmatpush1.bf16.msra.mxu0 %v416
        %429 = vmatprep.subr.bf16.mxu0 0
        %430 = vmatpush1.bf16.msra.mxu0 %v417
        %431 = vmatprep.subr.bf16.mxu0 0
        %432 = vmatpush1.bf16.msra.mxu0 0
        %433 = vmatprep.subr.bf16.mxu0 0
        %434 = vmatpush1.bf16.msra.mxu0 0
        %435 = vmatprep.subr.bf16.mxu0 0
        %436 = vmatpush1.bf16.msra.mxu0 0
        %437 = vmatprep.subr.bf16.mxu0 0
        %438 = vmatpush1.bf16.msra.mxu0 0
        %439 = vmatprep.subr.bf16.mxu0 0
        %440 = vmatpush1.bf16.msra.mxu0 0
        %441 = vmatprep.subr.bf16.mxu0 0
        %442 = vmatpush1.bf16.msra.mxu0 0
        %443 = vmatprep.subr.bf16.mxu0 0
        %444 = vmatpush1.bf16.msra.mxu0 0
        %445 = vmatprep.subr.bf16.mxu0 0
        %446 = vmatpush1.bf16.msra.mxu0 0
        %447 = vmatprep.subr.bf16.mxu0 0
        %448 = vmatpush1.bf16.msra.mxu0 0
        %449 = vmatprep.subr.bf16.mxu0 0
        %450 = vmatpush1.bf16.msra.mxu0 0
        %451 = vmatprep.subr.bf16.mxu0 0
        %452 = vmatpush1.bf16.msra.mxu0 0
        %453 = vmatprep.subr.bf16.mxu0 0
        %454 = vmatpush1.bf16.msra.mxu0 0
        %455 = vmatprep.subr.bf16.mxu0 0
        %456 = vmatpush1.bf16.msra.mxu0 0
        %457 = vmatprep.subr.bf16.mxu0 0
        %458 = vmatpush1.bf16.msra.mxu0 0
        %459 = vmatprep.mubr.bf16.mxu0 0
        %460 = vmatmul.mubr.bf16.gmra.mrb[0].mxu0 %v422
        %v461 = vpop.f32.mrb[0].mxu0
        %v462 = vadd.f32 0.0, %v461
        %v463 = vpop.f32.mrb[0].mxu0
        %v464 = vpop.f32.mrb[0].mxu0
        %v465 = vadd.f32 0.0, %v464
        %v466 = vpop.f32.mrb[0].mxu0
        %467 = vmatprep.mubr.bf16.mxu0 0
        %468 = vmatmul.mubr.bf16.gmra.mrb[0].mxu0 %v425
        %v469 = vpop.f32.mrb[0].mxu0
        %v470 = vadd.f32 0.0, %v469
        %v471 = vpop.f32.mrb[0].mxu0
        %v472 = vpop.f32.mrb[0].mxu0
        %v473 = vadd.f32 0.0, %v472
        %v474 = vpop.f32.mrb[0].mxu0
        %475 = vdwg.mxu0
        %v476 = vmax.f32 %v462, 0.0
        %v477 = vmax.f32 %v465, 0.0
        %v478 = vmax.f32 %v470, 0.0
        %v479 = vmax.f32 %v473, 0.0
        %v480 = vld [vmem:[%s3] sm:$0xf]
        %v481 = vld [vmem:[%s3 + $0x4] sm:$0xf]
        %v482 = vld [vmem:[%s3 + $0x8] sm:$0xf]
        %v483 = vld [vmem:[%s3 + $0xc] sm:$0xf]
        %v484 = vpack.c.bf16 %v477, %v476
        %v485 = vpack.c.bf16 %v479, %v478
        %v490 = vunpack.c.l.b16 %v480
        %v491 = vunpack.c.l.b16 %v481
        %v492 = vunpack.c.l.b16 %v482
        %v493 = vunpack.c.l.b16 %v483
        %v494 = vpack.c.b16 %v491, %v490
        %v495 = vpack.c.b16 %v493, %v492
        %v497 = vsel %vm420, %v494, 0
        %v500 = vsel %vm420, %v495, 0
        %502 = vmatprep.subr.bf16.mxu0 0
        %503 = vmatpush1.bf16.msra.mxu0 %v484
        %504 = vmatprep.subr.bf16.mxu0 0
        %505 = vmatpush1.bf16.msra.mxu0 %v485
        %506 = vmatprep.subr.bf16.mxu0 0
        %507 = vmatpush1.bf16.msra.mxu0 0
        %508 = vmatprep.subr.bf16.mxu0 0
        %509 = vmatpush1.bf16.msra.mxu0 0
        %510 = vmatprep.subr.bf16.mxu0 0
        %511 = vmatpush1.bf16.msra.mxu0 0
        %512 = vmatprep.subr.bf16.mxu0 0
        %513 = vmatpush1.bf16.msra.mxu0 0
        %514 = vmatprep.subr.bf16.mxu0 0
        %515 = vmatpush1.bf16.msra.mxu0 0
        %516 = vmatprep.subr.bf16.mxu0 0
        %517 = vmatpush1.bf16.msra.mxu0 0
        %518 = vmatprep.subr.bf16.mxu0 0
        %519 = vmatpush1.bf16.msra.mxu0 0
        %520 = vmatprep.subr.bf16.mxu0 0
        %521 = vmatpush1.bf16.msra.mxu0 0
        %522 = vmatprep.subr.bf16.mxu0 0
        %523 = vmatpush1.bf16.msra.mxu0 0
        %524 = vmatprep.subr.bf16.mxu0 0
        %525 = vmatpush1.bf16.msra.mxu0 0
        %526 = vmatprep.subr.bf16.mxu0 0
        %527 = vmatpush1.bf16.msra.mxu0 0
        %528 = vmatprep.subr.bf16.mxu0 0
        %529 = vmatpush1.bf16.msra.mxu0 0
        %530 = vmatprep.subr.bf16.mxu0 0
        %531 = vmatpush1.bf16.msra.mxu0 0
        %532 = vmatprep.subr.bf16.mxu0 0
        %533 = vmatpush1.bf16.msra.mxu0 0
        %534 = vmatprep.mubr.bf16.mxu0 0
        %535 = vmatmul.mubr.bf16.gmra.mrb[0].mxu0 %v497
        %v536 = vpop.f32.mrb[0].mxu0
        %v537 = vadd.f32 0.0, %v536
        %v538 = vpop.f32.mrb[0].mxu0
        %v539 = vpop.f32.mrb[0].mxu0
        %v540 = vadd.f32 0.0, %v539
        %v541 = vpop.f32.mrb[0].mxu0
        %542 = vmatprep.mubr.bf16.mxu0 0
        %543 = vmatmul.mubr.bf16.gmra.mrb[0].mxu0 %v500
        %v544 = vpop.f32.mrb[0].mxu0
        %v545 = vadd.f32 0.0, %v544
        %v546 = vpop.f32.mrb[0].mxu0
        %v547 = vpop.f32.mrb[0].mxu0
        %v548 = vadd.f32 0.0, %v547
        %v549 = vpop.f32.mrb[0].mxu0
        %550 = vdwg.mxu0
        %v551 = vmax.f32 %v537, 0.0
        %v552 = vmax.f32 %v540, 0.0
        %v553 = vmax.f32 %v545, 0.0
        %v554 = vmax.f32 %v548, 0.0
        %v555 = vld [vmem:[%s4] sm:$0xf]
        %v556 = vld [vmem:[%s4 + $0x4] sm:$0xf]
        %v557 = vld [vmem:[%s4 + $0x8] sm:$0xf]
        %v558 = vld [vmem:[%s4 + $0xc] sm:$0xf]
        %v559 = vld [vmem:[%s4 + $0x10] sm:$0xf]
        %v560 = vld [vmem:[%s4 + $0x14] sm:$0xf]
        %v561 = vld [vmem:[%s4 + $0x18] sm:$0xf]
        %v562 = vld [vmem:[%s4 + $0x1c] sm:$0xf]
        %v563 = vld [vmem:[%s4 + $0x20] sm:$0xf]
        %v564 = vld [vmem:[%s4 + $0x24] sm:$0xf]
        %v565 = vld [vmem:[%s4 + $0x28] sm:$0xf]
        %v566 = vld [vmem:[%s4 + $0x2c] sm:$0xf]
        %v567 = vld [vmem:[%s4 + $0x30] sm:$0xf]
        %v568 = vld [vmem:[%s4 + $0x34] sm:$0xf]
        %v569 = vld [vmem:[%s4 + $0x38] sm:$0xf]
        %v570 = vld [vmem:[%s4 + $0x3c] sm:$0xf]
        %v571 = vld [vmem:[%s4 + $0x40] sm:$0xf]
        %v572 = vld [vmem:[%s4 + $0x44] sm:$0xf]
        %v573 = vld [vmem:[%s4 + $0x48] sm:$0xf]
        %v574 = vld [vmem:[%s4 + $0x4c] sm:$0xf]
        %v575 = vld [vmem:[%s4 + $0x50] sm:$0xf]
        %v576 = vld [vmem:[%s4 + $0x54] sm:$0xf]
        %v577 = vld [vmem:[%s4 + $0x58] sm:$0xf]
        %v578 = vld [vmem:[%s4 + $0x5c] sm:$0xf]
        %v579 = vld [vmem:[%s4 + $0x60] sm:$0xf]
        %v580 = vld [vmem:[%s4 + $0x64] sm:$0xf]
        %v581 = vld [vmem:[%s4 + $0x68] sm:$0xf]
        %v582 = vld [vmem:[%s4 + $0x6c] sm:$0xf]
        %v583 = vld [vmem:[%s4 + $0x70] sm:$0xf]
        %v584 = vld [vmem:[%s4 + $0x74] sm:$0xf]
        %v585 = vld [vmem:[%s4 + $0x78] sm:$0xf]
        %v586 = vld [vmem:[%s4 + $0x7c] sm:$0xf]
        %v587 = vpack.c.bf16 %v552, %v551
        %v588 = vpack.c.bf16 %v554, %v553
        %v621 = vunpack.c.l.b16 %v555
        %v622 = vunpack.c.l.b16 %v556
        %v623 = vunpack.c.l.b16 %v557
        %v624 = vunpack.c.l.b16 %v558
        %v625 = vunpack.c.l.b16 %v559
        %v626 = vunpack.c.l.b16 %v560
        %v627 = vunpack.c.l.b16 %v561
        %v628 = vunpack.c.l.b16 %v562
        %v629 = vunpack.c.l.b16 %v563
        %v630 = vunpack.c.l.b16 %v564
        %v631 = vunpack.c.l.b16 %v565
        %v632 = vunpack.c.l.b16 %v566
        %v633 = vunpack.c.l.b16 %v567
        %v634 = vunpack.c.l.b16 %v568
        %v635 = vunpack.c.l.b16 %v569
        %v636 = vunpack.c.l.b16 %v570
        %v637 = vunpack.c.l.b16 %v571
        %v638 = vunpack.c.l.b16 %v572
        %v639 = vunpack.c.l.b16 %v573
        %v640 = vunpack.c.l.b16 %v574
        %v641 = vunpack.c.l.b16 %v575
        %v642 = vunpack.c.l.b16 %v576
        %v643 = vunpack.c.l.b16 %v577
        %v644 = vunpack.c.l.b16 %v578
        %v645 = vunpack.c.l.b16 %v579
        %v646 = vunpack.c.l.b16 %v580
        %v647 = vunpack.c.l.b16 %v581
        %v648 = vunpack.c.l.b16 %v582
        %v649 = vunpack.c.l.b16 %v583
        %v650 = vunpack.c.l.b16 %v584
        %v651 = vunpack.c.l.b16 %v585
        %v652 = vunpack.c.l.b16 %v586
        %v653 = vpack.c.b16 %v622, %v621
        %v654 = vpack.c.b16 %v624, %v623
        %v655 = vpack.c.b16 %v626, %v625
        %v656 = vpack.c.b16 %v628, %v627
        %v657 = vpack.c.b16 %v630, %v629
        %v658 = vpack.c.b16 %v632, %v631
        %v659 = vpack.c.b16 %v634, %v633
        %v660 = vpack.c.b16 %v636, %v635
        %v661 = vpack.c.b16 %v638, %v637
        %v662 = vpack.c.b16 %v640, %v639
        %v663 = vpack.c.b16 %v642, %v641
        %v664 = vpack.c.b16 %v644, %v643
        %v665 = vpack.c.b16 %v646, %v645
        %v666 = vpack.c.b16 %v648, %v647
        %v667 = vpack.c.b16 %v650, %v649
        %v668 = vpack.c.b16 %v652, %v651
        %v670 = vsel %vm420, %v653, 0
        %v673 = vsel %vm420, %v654, 0
        %v676 = vsel %vm420, %v655, 0
        %v679 = vsel %vm420, %v656, 0
        %v682 = vsel %vm420, %v657, 0
        %v685 = vsel %vm420, %v658, 0
        %v688 = vsel %vm420, %v659, 0
        %v691 = vsel %vm420, %v660, 0
        %v694 = vsel %vm420, %v661, 0
        %v697 = vsel %vm420, %v662, 0
        %v700 = vsel %vm420, %v663, 0
        %v703 = vsel %vm420, %v664, 0
        %v706 = vsel %vm420, %v665, 0
        %v709 = vsel %vm420, %v666, 0
        %v712 = vsel %vm420, %v667, 0
        %v715 = vsel %vm420, %v668, 0
        %717 = vmatprep.subr.bf16.mxu0 0
        %718 = vmatpush1.bf16.msra.mxu0 %v587
        %719 = vmatprep.subr.bf16.mxu0 0
        %720 = vmatpush1.bf16.msra.mxu0 %v588
        %721 = vmatprep.subr.bf16.mxu0 0
        %722 = vmatpush1.bf16.msra.mxu0 0
        %723 = vmatprep.subr.bf16.mxu0 0
        %724 = vmatpush1.bf16.msra.mxu0 0
        %725 = vmatprep.subr.bf16.mxu0 0
        %726 = vmatpush1.bf16.msra.mxu0 0
        %727 = vmatprep.subr.bf16.mxu0 0
        %728 = vmatpush1.bf16.msra.mxu0 0
        %729 = vmatprep.subr.bf16.mxu0 0
        %730 = vmatpush1.bf16.msra.mxu0 0
        %731 = vmatprep.subr.bf16.mxu0 0
        %732 = vmatpush1.bf16.msra.mxu0 0
        %733 = vmatprep.subr.bf16.mxu0 0
        %734 = vmatpush1.bf16.msra.mxu0 0
        %735 = vmatprep.subr.bf16.mxu0 0
        %736 = vmatpush1.bf16.msra.mxu0 0
        %737 = vmatprep.subr.bf16.mxu0 0
        %738 = vmatpush1.bf16.msra.mxu0 0
        %739 = vmatprep.subr.bf16.mxu0 0
        %740 = vmatpush1.bf16.msra.mxu0 0
        %741 = vmatprep.subr.bf16.mxu0 0
        %742 = vmatpush1.bf16.msra.mxu0 0
        %743 = vmatprep.subr.bf16.mxu0 0
        %744 = vmatpush1.bf16.msra.mxu0 0
        %745 = vmatprep.subr.bf16.mxu0 0
        %746 = vmatpush1.bf16.msra.mxu0 0
        %747 = vmatprep.subr.bf16.mxu0 0
        %748 = vmatpush1.bf16.msra.mxu0 0
        %749 = vmatprep.mubr.bf16.mxu0 0
        %750 = vmatmul.mubr.bf16.gmra.mrb[0].mxu0 %v670
        %v751 = vpop.f32.mrb[0].mxu0
        %v752 = vadd.f32 0.0, %v751
        %v753 = vpop.f32.mrb[0].mxu0
        %v754 = vpop.f32.mrb[0].mxu0
        %v755 = vadd.f32 0.0, %v754
        %v756 = vpop.f32.mrb[0].mxu0
        %757 = vmatprep.mubr.bf16.mxu0 0
        %758 = vmatmul.mubr.bf16.gmra.mrb[0].mxu0 %v673
        %v759 = vpop.f32.mrb[0].mxu0
        %v760 = vadd.f32 0.0, %v759
        %v761 = vpop.f32.mrb[0].mxu0
        %v762 = vpop.f32.mrb[0].mxu0
        %v763 = vadd.f32 0.0, %v762
        %v764 = vpop.f32.mrb[0].mxu0
        %765 = vmatprep.mubr.bf16.mxu0 0
        %766 = vmatmul.mubr.bf16.gmra.mrb[0].mxu0 %v676
        %v767 = vpop.f32.mrb[0].mxu0
        %v768 = vadd.f32 0.0, %v767
        %v769 = vpop.f32.mrb[0].mxu0
        %v770 = vpop.f32.mrb[0].mxu0
        %v771 = vadd.f32 0.0, %v770
        %v772 = vpop.f32.mrb[0].mxu0
        %773 = vmatprep.mubr.bf16.mxu0 0
        %774 = vmatmul.mubr.bf16.gmra.mrb[0].mxu0 %v679
        %v775 = vpop.f32.mrb[0].mxu0
        %v776 = vadd.f32 0.0, %v775
        %v777 = vpop.f32.mrb[0].mxu0
        %v778 = vpop.f32.mrb[0].mxu0
        %v779 = vadd.f32 0.0, %v778
        %v780 = vpop.f32.mrb[0].mxu0
        %781 = vmatprep.mubr.bf16.mxu0 0
        %782 = vmatmul.mubr.bf16.gmra.mrb[0].mxu0 %v682
        %v783 = vpop.f32.mrb[0].mxu0
        %v784 = vadd.f32 0.0, %v783
        %v785 = vpop.f32.mrb[0].mxu0
        %v786 = vpop.f32.mrb[0].mxu0
        %v787 = vadd.f32 0.0, %v786
        %v788 = vpop.f32.mrb[0].mxu0
        %789 = vmatprep.mubr.bf16.mxu0 0
        %790 = vmatmul.mubr.bf16.gmra.mrb[0].mxu0 %v685
        %v791 = vpop.f32.mrb[0].mxu0
        %v792 = vadd.f32 0.0, %v791
        %v793 = vpop.f32.mrb[0].mxu0
        %v794 = vpop.f32.mrb[0].mxu0
        %v795 = vadd.f32 0.0, %v794
        %v796 = vpop.f32.mrb[0].mxu0
        %797 = vmatprep.mubr.bf16.mxu0 0
        %798 = vmatmul.mubr.bf16.gmra.mrb[0].mxu0 %v688
        %v799 = vpop.f32.mrb[0].mxu0
        %v800 = vadd.f32 0.0, %v799
        %v801 = vpop.f32.mrb[0].mxu0
        %v802 = vpop.f32.mrb[0].mxu0
        %v803 = vadd.f32 0.0, %v802
        %v804 = vpop.f32.mrb[0].mxu0
        %805 = vmatprep.mubr.bf16.mxu0 0
        %806 = vmatmul.mubr.bf16.gmra.mrb[0].mxu0 %v691
        %v807 = vpop.f32.mrb[0].mxu0
        %v808 = vadd.f32 0.0, %v807
        %v809 = vpop.f32.mrb[0].mxu0
        %v810 = vpop.f32.mrb[0].mxu0
        %v811 = vadd.f32 0.0, %v810
        %v812 = vpop.f32.mrb[0].mxu0
        %813 = vmatprep.mubr.bf16.mxu0 0
        %814 = vmatmul.mubr.bf16.gmra.mrb[0].mxu0 %v694
        %v815 = vpop.f32.mrb[0].mxu0
        %v816 = vadd.f32 0.0, %v815
        %v817 = vpop.f32.mrb[0].mxu0
        %v818 = vpop.f32.mrb[0].mxu0
        %v819 = vadd.f32 0.0, %v818
        %v820 = vpop.f32.mrb[0].mxu0
        %821 = vmatprep.mubr.bf16.mxu0 0
        %822 = vmatmul.mubr.bf16.gmra.mrb[0].mxu0 %v697
        %v823 = vpop.f32.mrb[0].mxu0
        %v824 = vadd.f32 0.0, %v823
        %v825 = vpop.f32.mrb[0].mxu0
        %v826 = vpop.f32.mrb[0].mxu0
        %v827 = vadd.f32 0.0, %v826
        %v828 = vpop.f32.mrb[0].mxu0
        %829 = vmatprep.mubr.bf16.mxu0 0
        %830 = vmatmul.mubr.bf16.gmra.mrb[0].mxu0 %v700
        %v831 = vpop.f32.mrb[0].mxu0
        %v832 = vadd.f32 0.0, %v831
        %v833 = vpop.f32.mrb[0].mxu0
        %v834 = vpop.f32.mrb[0].mxu0
        %v835 = vadd.f32 0.0, %v834
        %v836 = vpop.f32.mrb[0].mxu0
        %837 = vmatprep.mubr.bf16.mxu0 0
        %838 = vmatmul.mubr.bf16.gmra.mrb[0].mxu0 %v703
        %v839 = vpop.f32.mrb[0].mxu0
        %v840 = vadd.f32 0.0, %v839
        %v841 = vpop.f32.mrb[0].mxu0
        %v842 = vpop.f32.mrb[0].mxu0
        %v843 = vadd.f32 0.0, %v842
        %v844 = vpop.f32.mrb[0].mxu0
        %845 = vmatprep.mubr.bf16.mxu0 0
        %846 = vmatmul.mubr.bf16.gmra.mrb[0].mxu0 %v706
        %v847 = vpop.f32.mrb[0].mxu0
        %v848 = vadd.f32 0.0, %v847
        %v849 = vpop.f32.mrb[0].mxu0
        %v850 = vpop.f32.mrb[0].mxu0
        %v851 = vadd.f32 0.0, %v850
        %v852 = vpop.f32.mrb[0].mxu0
        %853 = vmatprep.mubr.bf16.mxu0 0
        %854 = vmatmul.mubr.bf16.gmra.mrb[0].mxu0 %v709
        %v855 = vpop.f32.mrb[0].mxu0
        %v856 = vadd.f32 0.0, %v855
        %v857 = vpop.f32.mrb[0].mxu0
        %v858 = vpop.f32.mrb[0].mxu0
        %v859 = vadd.f32 0.0, %v858
        %v860 = vpop.f32.mrb[0].mxu0
        %861 = vmatprep.mubr.bf16.mxu0 0
        %862 = vmatmul.mubr.bf16.gmra.mrb[0].mxu0 %v712
        %v863 = vpop.f32.mrb[0].mxu0
        %v864 = vadd.f32 0.0, %v863
        %v865 = vpop.f32.mrb[0].mxu0
        %v866 = vpop.f32.mrb[0].mxu0
        %v867 = vadd.f32 0.0, %v866
        %v868 = vpop.f32.mrb[0].mxu0
        %869 = vmatprep.mubr.bf16.mxu0 0
        %870 = vmatmul.mubr.bf16.gmra.mrb[0].mxu0 %v715
        %v871 = vpop.f32.mrb[0].mxu0
        %v872 = vadd.f32 0.0, %v871
        %v873 = vpop.f32.mrb[0].mxu0
        %v874 = vpop.f32.mrb[0].mxu0
        %v875 = vadd.f32 0.0, %v874
        %v876 = vpop.f32.mrb[0].mxu0
        %877 = vdwg.mxu0
        %v878 = vld [vmem:[%s353] sm:$0xf]
        %v879 = vld [vmem:[%s353 + $0x4] sm:$0xf]
        %v880 = vld [vmem:[%s353 + $0x8] sm:$0xf]
        %v881 = vld [vmem:[%s353 + $0xc] sm:$0xf]
        %v882 = vunpack.c.l.bf16 %v878
        %v883 = vunpack.c.l.bf16 %v879
        %v884 = vunpack.c.l.bf16 %v880
        %v885 = vunpack.c.l.bf16 %v881
        %v886 = vmul.f32 %v752, %v882
        %v887 = vmul.f32 %v755, %v883
        %v888 = vmul.f32 %v760, %v884
        %v889 = vmul.f32 %v763, %v885
        %v890 = vmul.f32 %v768, %v882
        %v891 = vmul.f32 %v771, %v883
        %v892 = vmul.f32 %v776, %v884
        %v893 = vmul.f32 %v779, %v885
        %v894 = vmul.f32 %v784, %v882
        %v895 = vmul.f32 %v787, %v883
        %v896 = vmul.f32 %v792, %v884
        %v897 = vmul.f32 %v795, %v885
        %v898 = vmul.f32 %v800, %v882
        %v899 = vmul.f32 %v803, %v883
        %v900 = vmul.f32 %v808, %v884
        %v901 = vmul.f32 %v811, %v885
        %v902 = vmul.f32 %v816, %v882
        %v903 = vmul.f32 %v819, %v883
        %v904 = vmul.f32 %v824, %v884
        %v905 = vmul.f32 %v827, %v885
        %v906 = vmul.f32 %v832, %v882
        %v907 = vmul.f32 %v835, %v883
        %v908 = vmul.f32 %v840, %v884
        %v909 = vmul.f32 %v843, %v885
        %v910 = vmul.f32 %v848, %v882
        %v911 = vmul.f32 %v851, %v883
        %v912 = vmul.f32 %v856, %v884
        %v913 = vmul.f32 %v859, %v885
        %v914 = vmul.f32 %v864, %v882
        %v915 = vmul.f32 %v867, %v883
        %v916 = vmul.f32 %v872, %v884
        %v917 = vmul.f32 %v875, %v885
        %v918 = vadd.f32 %v886, %v887
        %v919 = vadd.f32 %v918, %v888
        %v920 = vadd.f32 %v919, %v889
        %v921 = vrot.slane %v920, 4
        %v922 = vadd.f32 %v920, %v921
        %v923 = vrot.slane %v922, 2
        %v924 = vadd.f32 %v922, %v923
        %v925 = vrot.slane %v924, 1
        %v926 = vadd.f32 %v924, %v925
        %v927 = vadd.f32 %v890, %v891
        %v928 = vadd.f32 %v927, %v892
        %v929 = vadd.f32 %v928, %v893
        %v930 = vrot.slane %v929, 4
        %v931 = vadd.f32 %v929, %v930
        %v932 = vrot.slane %v931, 2
        %v933 = vadd.f32 %v931, %v932
        %v934 = vrot.slane %v933, 1
        %v935 = vadd.f32 %v933, %v934
        %v936 = vadd.f32 %v894, %v895
        %v937 = vadd.f32 %v936, %v896
        %v938 = vadd.f32 %v937, %v897
        %v939 = vrot.slane %v938, 4
        %v940 = vadd.f32 %v938, %v939
        %v941 = vrot.slane %v940, 2
        %v942 = vadd.f32 %v940, %v941
        %v943 = vrot.slane %v942, 1
        %v944 = vadd.f32 %v942, %v943
        %v945 = vadd.f32 %v898, %v899
        %v946 = vadd.f32 %v945, %v900
        %v947 = vadd.f32 %v946, %v901
        %v948 = vrot.slane %v947, 4
        %v949 = vadd.f32 %v947, %v948
        %v950 = vrot.slane %v949, 2
        %v951 = vadd.f32 %v949, %v950
        %v952 = vrot.slane %v951, 1
        %v953 = vadd.f32 %v951, %v952
        %v954 = vadd.f32 %v902, %v903
        %v955 = vadd.f32 %v954, %v904
        %v956 = vadd.f32 %v955, %v905
        %v957 = vrot.slane %v956, 4
        %v958 = vadd.f32 %v956, %v957
        %v959 = vrot.slane %v958, 2
        %v960 = vadd.f32 %v958, %v959
        %v961 = vrot.slane %v960, 1
        %v962 = vadd.f32 %v960, %v961
        %v963 = vadd.f32 %v906, %v907
        %v964 = vadd.f32 %v963, %v908
        %v965 = vadd.f32 %v964, %v909
        %v966 = vrot.slane %v965, 4
        %v967 = vadd.f32 %v965, %v966
        %v968 = vrot.slane %v967, 2
        %v969 = vadd.f32 %v967, %v968
        %v970 = vrot.slane %v969, 1
        %v971 = vadd.f32 %v969, %v970
        %v972 = vadd.f32 %v910, %v911
        %v973 = vadd.f32 %v972, %v912
        %v974 = vadd.f32 %v973, %v913
        %v975 = vrot.slane %v974, 4
        %v976 = vadd.f32 %v974, %v975
        %v977 = vrot.slane %v976, 2
        %v978 = vadd.f32 %v976, %v977
        %v979 = vrot.slane %v978, 1
        %v980 = vadd.f32 %v978, %v979
        %v981 = vadd.f32 %v914, %v915
        %v982 = vadd.f32 %v981, %v916
        %v983 = vadd.f32 %v982, %v917
        %v984 = vrot.slane %v983, 4
        %v985 = vadd.f32 %v983, %v984
        %v986 = vrot.slane %v985, 2
        %v987 = vadd.f32 %v985, %v986
        %v988 = vrot.slane %v987, 1
        %v989 = vadd.f32 %v987, %v988
        %v990 = vmax.f32 %v926, %v935
        %v991 = vmax.f32 %v944, %v953
        %v992 = vmax.f32 %v990, %v991
        %v993 = vsub.f32 %v926, %v992
        %v994 = vsub.f32 %v935, %v992
        %v995 = vsub.f32 %v944, %v992
        %v996 = vsub.f32 %v953, %v992
        %v997 = vmul.f32 %v993, 1.442695
        %v998 = vpow.pop %v997
        %v999 = vmul.f32 %v994, 1.442695
        %v1000 = vpow.pop %v999
        %v1001 = vmul.f32 %v995, 1.442695
        %v1002 = vpow.pop %v1001
        %v1003 = vmul.f32 %v996, 1.442695
        %v1004 = vpow.pop %v1003
        %v1009 = vrot.slane %v1000, 7
        %vm1010 = vcmask 1041409
        %v1011 = vsel %vm1010, %v1009, %v998
        %v1012 = vrot.slane %v1002, 6
        %vm1013 = vcmask 1042434
        %v1014 = vsel %vm1013, %v1012, %v1011
        %v1015 = vrot.slane %v1004, 5
        %vm1016 = vcmask 1043459
        %v1017 = vsel %vm1016, %v1015, %v1014
        %vm1019 = vcmask 1043456
        %v1020 = vsel %vm1019, %v1017, 0.0
        %v1021 = vrot.slane %v1020, 4
        %v1022 = vadd.f32 %v1020, %v1021
        %v1023 = vrot.slane %v1022, 2
        %v1024 = vadd.f32 %v1022, %v1023
        %v1025 = vrot.slane %v1024, 1
        %v1026 = vadd.f32 %v1024, %v1025
        %v1027 = vlaneseq
        %v1028 = vshrl.u32 %v1027, 7
        %v1029 = vsub.s32 0, %v1028
        %v1030 = vrot.slane %v1026, %v1029
        %v1031 = vrcp.pop %v1030
        %v1032 = vmul.f32 %v998, %v1031
        %v1033 = vmul.f32 %v1000, %v1031
        %v1034 = vmul.f32 %v1002, %v1031
        %v1035 = vmul.f32 %v1004, %v1031
        %v1036 = vmul.f32 %v1032, %v962
        %v1037 = vmul.f32 %v1033, %v971
        %v1038 = vmul.f32 %v1034, %v980
        %v1039 = vmul.f32 %v1035, %v989
        %v1044 = vrot.slane %v1037, 7
        %v1045 = vsel %vm1010, %v1044, %v1036
        %v1046 = vrot.slane %v1038, 6
        %v1047 = vsel %vm1013, %v1046, %v1045
        %v1048 = vrot.slane %v1039, 5
        %v1049 = vsel %vm1016, %v1048, %v1047
        %v1051 = vsel %vm1019, %v1049, 0.0
        %v1052 = vrot.slane %v1051, 4
        %v1053 = vadd.f32 %v1051, %v1052
        %v1054 = vrot.slane %v1053, 2
        %v1055 = vadd.f32 %v1053, %v1054
        %v1056 = vrot.slane %v1055, 1
        %v1057 = vadd.f32 %v1055, %v1056
        %v1058 = vld [vmem:[%s388] sm:$0x1]
        %v1059 = vadd.f32 %v1057, %v1058
        %1060 = vst [vmem:[%s385] sm:$0x1] %v1059
        %s1061 = sand.u32 %s169, 1
        %s1062 = scalar_lea.sflag [#allocation5], %s1061
        %s1063 = sand.u32 %s169, 1
        %s1064 = scalar_lea.vmem [#allocation4], %s1063
        // Predicated region
        $region127: #{tpu_custom_call.1} parent=117 // pred_check
          %p1065 = pneg %p179
        $region128: #{tpu_custom_call.1} parent=117 // pred_check_branch
          %1067 = sbr.rel (%p1065) target = $region130
        $region129: #{tpu_custom_call.1} parent=117 // pred_region
          %s1069 = ssub.s32 16, 16
          %1070 = vsyncadd %s1062, %s1069
          %s1071 = smul.addr %s20, 16
          %s1072 = scalar_lea.hbm %s6, %s1071
          %s1074 = sshll.u32 %s1064, 4
          %s1075 = int_to_ptr.vmem [resolvable:$true] %s1074
          %1077 = dma.vmem_to_hbm [thread:$0]  %s1075, 16, %s1072, %s1062
        $region130: #{tpu_custom_call.1} parent=117 // pred_fallthru
          _
      $region118: #{tpu_custom_call.1} parent=5 // pred_fallthru
        _
      %p1078 = scmp.le.s32.totalorder 2, %s15
      // Predicated region
      $region131: #{tpu_custom_call.1} parent=5 // pred_check
        %p1079 = pneg %p1078
      $region132: #{tpu_custom_call.1} parent=5 // pred_check_branch
        %1081 = sbr.rel (%p1079) target = $region134
      $region133: #{tpu_custom_call.1} parent=5 // pred_region
        %s1082 = ssub.s32 %s15, 2
        // Predicated region
        $region135: #{tpu_custom_call.1} parent=133 // pred_check
          %p1083 = pneg %p185
        $region136: #{tpu_custom_call.1} parent=133 // pred_check_branch
          %1085 = sbr.rel (%p1083) target = $region138
        $region137: #{tpu_custom_call.1} parent=133 // pred_region
          %s1086 = sand.u32 %s170, 1
          %s1087 = scalar_lea.sflag [#allocation5], %s1086
          %s1088 = sand.u32 %s170, 1
          %s1089 = scalar_lea.vmem [#allocation4], %s1088
          %1090 = dma.done %s1087, 16
        $region138: #{tpu_custom_call.1} parent=133 // pred_fallthru
          _
      $region134: #{tpu_custom_call.1} parent=5 // pred_fallthru
        _
    $region6: #{tpu_custom_call.1} parent=1 // loop_footer
      %s19 = sadd.s32 1, %s15
    $region7: #{tpu_custom_call.1} parent=1 // loop_footer_branch
      %14 = sbr.rel target = $region3
    $region8: #{tpu_custom_call.1} parent=1 // loop_exit
      _
    %1091 = vsyncpa [#allocation5], 1
    %s1092 = scalar_lea.sflag [#allocation5], 1
    %1093 = vsyncpa %s1092, 1

</llo_original>
